<compile_context>
chip_gen: v7x
topology: tpu7x:2x2x1
jax: 0.10.0
libtpu: 0.0.40
codegen_flags: <defaults>
</compile_context>

<pallas_src>
import math

import jax
import jax.numpy as jnp
from jax.experimental import pallas as pl
from jax.experimental.pallas import tpu as pltpu


def _make_kernel(native_combine):
    """Kernel body.

    x_ref / x0_ref / o_ref : (tm, D) tiles.
    w_ref                  : (1, D), grid-resident.
    b_ref                  : (1,) f32 scalar in SMEM.
    """
    if native_combine:
        # bf16 inputs on a bf16-VALU chip (v6e/v7x): elementwise combine in
        # bf16; only the per-row dot accumulates in f32.
        def kernel(x_ref, x0_ref, w_ref, b_ref, o_ref):
            dt = o_ref.dtype
            prod = (x_ref[...] * w_ref[...]).astype(jnp.float32)      # VPU mul (bf16)
            corr = jnp.sum(prod, axis=-1, keepdims=True).astype(dt)   # XLU reduce, f32 acc
            o_ref[...] = x0_ref[...] * corr + x_ref[...] + b_ref[0].astype(dt)
    else:
        # Full-f32 path (f32 inputs, or sub-f32 inputs on v5e and older).
        def kernel(x_ref, x0_ref, w_ref, b_ref, o_ref):
            xf = x_ref[...].astype(jnp.float32)
            wf = w_ref[...].astype(jnp.float32)
            corr = jnp.sum(xf * wf, axis=-1, keepdims=True)           # (tm, 1) f32
            out = x0_ref[...].astype(jnp.float32) * corr + b_ref[0] + xf
            o_ref[...] = out.astype(o_ref.dtype)

    return kernel


def _vmem_capacity_bytes():
    try:
        return int(pltpu.get_tpu_info().vmem_capacity_bytes)
    except Exception:
        return 64 * 1024 * 1024      # conservative fallback = v7x per-core VMEM


def _use_native_combine(dtype):
    """bf16 elementwise combine only where a bf16 VALU exists (v6e/v7x)."""
    if jnp.dtype(dtype) != jnp.dtype(jnp.bfloat16):
        return False
    try:
        kind = jax.devices()[0].device_kind.lower()
    except Exception:
        return False
    return any(t in kind for t in ("v6", "v7", "7x"))


def _choose_tm(M, D, itemsize):
    """Pick a row-tile size from real per-tile VMEM usage (chip-aware)."""
    cap = _vmem_capacity_bytes()
    # Minimum sublane multiple per dtype width (f32 / bf16 / int8-fp8).
    sub = {4: 8, 2: 16, 1: 32}.get(itemsize, 8)
    # Per-row VMEM bytes: 3 double-buffered streams (x, x_0, out) plus up to
    # 3 full-width f32 elementwise temporaries inside the kernel.
    per_row = 6 * D * itemsize + 3 * D * 4
    budget = cap // 4                        # leave headroom for compiler scratch
    tm = budget // max(per_row, 1)
    tm = max(sub, min(tm, 1024))             # target the 256-1024 row sweet spot
    tm -= tm % sub
    # Keep the grid a few steps long so parallel sharding has work.
    while tm > 256 and pl.cdiv(M, tm) < 4:
        tm = max(256, tm // 2)
        tm -= tm % sub
    # Clamp to the problem: block rows must be a sublane multiple or equal the
    # full first dim; the ragged last block is masked by Pallas (no padding).
    if M <= sub:
        tm = M
    else:
        tm = min(tm, (M // sub) * sub)
    tm = max(tm, 1)
    # Scoped-VMEM request: actual tile bytes + ~25% headroom, floored so tiny
    # problems never under-provision, capped at 3/4 of physical VMEM.
    vmem_limit = int(tm * per_row * 1.25) + (1 << 20)
    vmem_limit = max(vmem_limit, 16 * 1024 * 1024)
    vmem_limit = min(vmem_limit, cap * 3 // 4)
    return tm, int(vmem_limit)


def cross_layer(x, x_0, weight, bias):
    """x, x_0: (B, S, D); weight: (1, D); bias: (1,) -> out (B, S, D)."""
    B, S, D = x.shape
    assert x_0.shape == (B, S, D)
    M = B * S
    itemsize = jnp.dtype(x.dtype).itemsize

    native = _use_native_combine(x.dtype)

    # Free reshapes only — no padding, no extra HBM passes.
    x2 = x.reshape(M, D)
    x02 = x_0.reshape(M, D)
    w2 = weight.reshape(1, D)
    if native:
        w2 = w2.astype(x.dtype)               # keep the row-dot multiply in bf16
    b1 = bias.reshape(1).astype(jnp.float32)  # scalar bias -> SMEM, f32

    tm, vmem_limit = _choose_tm(M, D, itemsize)
    grid = (pl.cdiv(M, tm),)                  # ragged last block masked by Pallas

    cost = pl.CostEstimate(
        flops=5 * M * D,
        transcendentals=0,
        bytes_accessed=3 * M * D * itemsize + D * itemsize + 4,
    )

    out = pl.pallas_call(
        _make_kernel(native),
        out_shape=jax.ShapeDtypeStruct((M, D), x.dtype),
        grid_spec=pltpu.PrefetchScalarGridSpec(
            num_scalar_prefetch=0,
            grid=grid,
            in_specs=[
                pl.BlockSpec((tm, D), lambda i: (i, 0)),            # x tile
                pl.BlockSpec((tm, D), lambda i: (i, 0)),            # x_0 tile
                pl.BlockSpec((1, D), lambda i: (0, 0)),             # weight (resident)
                pl.BlockSpec(memory_space=pltpu.MemorySpace.SMEM),  # bias scalar
            ],
            out_specs=pl.BlockSpec((tm, D), lambda i: (i, 0)),
        ),
        compiler_params=pltpu.CompilerParams(
            dimension_semantics=("parallel",),
            vmem_limit_bytes=vmem_limit,
        ),
        cost_estimate=cost,
    )(x2, x02, w2, b1)

    return out.reshape(B, S, D)


def cross_layer_ref(x, x_0, weight, bias):
    corr = jnp.einsum("bsd,od->bso", x.astype(jnp.float32),
                      weight.astype(jnp.float32))                   # (B, S, 1)
    return (x_0.astype(jnp.float32) * corr
            + bias.reshape(1, 1, 1).astype(jnp.float32)
            + x.astype(jnp.float32))


if __name__ == "__main__":
    B, S, D = 2, 8, 32
    key = jax.random.PRNGKey(0)
    kx, kx0, kw, kb = jax.random.split(key, 4)

    x = jax.random.normal(kx, (B, S, D), dtype=jnp.float32)
    x_0 = jax.random.normal(kx0, (B, S, D), dtype=jnp.float32)
    # Deterministic parameter init (shapes from nn.Linear(dim, 1)):
    bound = 1.0 / math.sqrt(D)
    weight = jax.random.uniform(kw, (1, D), jnp.float32, -bound, bound)
    bias = jax.random.uniform(kb, (1,), jnp.float32, -bound, bound)

    out = jax.block_until_ready(cross_layer(x, x_0, weight, bias))
    ref = cross_layer_ref(x, x_0, weight, bias)
    assert out.shape == (B, S, D)
    assert jnp.allclose(out, ref, atol=1e-5, rtol=1e-5)

    # Ragged / non-multiple-of-128 feature dim: exercises the no-padding path
    # (partial last row-block + masked lane stores), M=21, D=20.
    B2, S2, D2 = 3, 7, 20
    kx2, kx02, kw2, kb2 = jax.random.split(jax.random.PRNGKey(1), 4)
    xr = jax.random.normal(kx2, (B2, S2, D2), dtype=jnp.float32)
    x0r = jax.random.normal(kx02, (B2, S2, D2), dtype=jnp.float32)
    br = 1.0 / math.sqrt(D2)
    wr = jax.random.uniform(kw2, (1, D2), jnp.float32, -br, br)
    biasr = jax.random.uniform(kb2, (1,), jnp.float32, -br, br)
    outr = jax.block_until_ready(cross_layer(xr, x0r, wr, biasr))
    refr = cross_layer_ref(xr, x0r, wr, biasr)
    assert outr.shape == (B2, S2, D2)
    assert jnp.allclose(outr, refr, atol=1e-5, rtol=1e-5)

    # bf16 inputs (native bf16 combine on v6e/v7x, f32 path elsewhere).
    xb = x.astype(jnp.bfloat16)
    x0b = x_0.astype(jnp.bfloat16)
    wb = weight.astype(jnp.bfloat16)
    outb = jax.block_until_ready(cross_layer(xb, x0b, wb, bias))
    assert outb.shape == (B, S, D)
    assert jnp.allclose(outb.astype(jnp.float32), ref, atol=1e-1, rtol=5e-2)

    print("KERNEL_OK")
</pallas_src>

<mosaic_0001>
module attributes {stable_mosaic.version = 11 : i64} {
  func.func @kernel(%arg0: i32, %arg1: memref<16x32xf32, #tpu.memory_space<vmem>>, %arg2: memref<16x32xf32, #tpu.memory_space<vmem>>, %arg3: memref<1x32xf32, #tpu.memory_space<vmem>>, %arg4: memref<1xf32, #tpu.memory_space<smem>>, %arg5: memref<16x32xf32, #tpu.memory_space<vmem>>) attributes {dimension_semantics = [#tpu.dimension_semantics<parallel>], iteration_bounds = array<i64: 1>, scalar_prefetch = 0 : i64, scratch_operands = 0 : i64, tpu.core_type = #tpu.core_type<tc>, window_params = [{transform_indices = @transform_0, window_bounds = array<i64: 16, 32>}, {transform_indices = @transform_1, window_bounds = array<i64: 16, 32>}, {pipeline_mode = #tpu.pipeline_mode<synchronous>, transform_indices = @transform_2, window_bounds = array<i64: 1, 32>}, {transform_indices = @transform_3, window_bounds = array<i64: 1>}, {transform_indices = @transform_4, window_bounds = array<i64: 16, 32>}]} {
    %c0 = arith.constant 0 : index
    %c0_0 = arith.constant 0 : index
    %0 = vector.load %arg1[%c0, %c0_0] : memref<16x32xf32, #tpu.memory_space<vmem>>, vector<16x32xf32>
    %c0_1 = arith.constant 0 : index
    %c0_2 = arith.constant 0 : index
    %1 = vector.load %arg3[%c0_1, %c0_2] : memref<1x32xf32, #tpu.memory_space<vmem>>, vector<1x32xf32>
    %2 = vector.broadcast %1 : vector<1x32xf32> to vector<16x32xf32>
    %3 = arith.mulf %0, %2 : vector<16x32xf32>
    %cst = arith.constant dense<0.000000e+00> : vector<16xf32>
    %4 = vector.multi_reduction <add>, %3, %cst [1] : vector<16x32xf32> to vector<16xf32>
    %5 = vector.shape_cast %4 : vector<16xf32> to vector<16x1xf32>
    %c0_3 = arith.constant 0 : index
    %c0_4 = arith.constant 0 : index
    %6 = vector.load %arg2[%c0_3, %c0_4] : memref<16x32xf32, #tpu.memory_space<vmem>>, vector<16x32xf32>
    %7 = vector.broadcast %5 : vector<16x1xf32> to vector<16x32xf32>
    %8 = arith.mulf %6, %7 : vector<16x32xf32>
    %c0_5 = arith.constant 0 : index
    %9 = memref.load %arg4[%c0_5] : memref<1xf32, #tpu.memory_space<smem>>
    %10 = vector.broadcast %9 : f32 to vector<16x32xf32>
    %11 = arith.addf %8, %10 : vector<16x32xf32>
    %12 = arith.addf %11, %0 : vector<16x32xf32>
    %c0_6 = arith.constant 0 : index
    %c0_7 = arith.constant 0 : index
    %13 = vector.load %arg5[%c0_6, %c0_7] : memref<16x32xf32, #tpu.memory_space<vmem>>, vector<16x32xf32>
    tpu.vector_store %arg5[%c0_6, %c0_7], %12 {strides = array<i32>} : memref<16x32xf32, #tpu.memory_space<vmem>>, vector<16x32xf32>,
    return
  }
  func.func @transform_0(%arg0: i32) -> (i32, i32) {
    %c0_i32 = arith.constant 0 : i32
    %c0_i32_0 = arith.constant 0 : i32
    return %arg0, %c0_i32 : i32, i32
  }
  func.func @transform_1(%arg0: i32) -> (i32, i32) {
    %c0_i32 = arith.constant 0 : i32
    %c0_i32_0 = arith.constant 0 : i32
    return %arg0, %c0_i32 : i32, i32
  }
  func.func @transform_2(%arg0: i32) -> (i32, i32) {
    %c0_i32 = arith.constant 0 : i32
    %c0_i32_0 = arith.constant 0 : i32
    %c0_i32_1 = arith.constant 0 : i32
    return %c0_i32, %c0_i32_0 : i32, i32
  }
  func.func @transform_3(%arg0: i32) -> i32 {
    %c0_i32 = arith.constant 0 : i32
    %c0_i32_0 = arith.constant 0 : i32
    return %c0_i32 : i32
  }
  func.func @transform_4(%arg0: i32) -> (i32, i32) {
    %c0_i32 = arith.constant 0 : i32
    %c0_i32_0 = arith.constant 0 : i32
    return %arg0, %c0_i32 : i32, i32
  }
}

</mosaic_0001>

<llo_original>
// kernel: tpu_custom_call.1
$region0: #{tpu_custom_call.1}
  #allocation0 [shape = 'u32[]', space=smem, size = 0x4, offset = 0x4, fixed_abs, tag = 'smem constant byte address 0x4 - core index']
  #allocation1 [shape = 'u32[144,128]{1,0:T(1,128)}', space=vmem, size = 0x12000, scoped, tag = 'internal scratch']
  #allocation2 [shape = 'f32[1]{0:T(128)S(6)}', space=smem, size = 0x200, scoped, tag = 'scoped memory for tpu_custom_call.1']
  %s0 = inlined_call_operand.hbm [shape: f32[16,32], index: 0, kind: input, shape index: {}]
  %s1 = inlined_call_operand.hbm [shape: f32[16,32], index: 1, kind: input, shape index: {}]
  %s2 = inlined_call_operand.vmem [shape: f32[1,32], index: 2, kind: input, shape index: {}]
  %s3 = inlined_call_operand.<no memory space> [shape: f32[1], index: 3, kind: input, shape index: {}]
  %s4 = inlined_call_operand.hbm [shape: f32[16,32], index: 4, kind: output, shape index: {}]
  %s5 = sld [smem:[#allocation0]]
  $region34: #{tpu_custom_call.1} parent=0
    _
  %s7 = ssub.s32 1, %s5
  %s8 = scalar_select 0, %s7, %s5
  %9 = sst [smem:[#allocation2]] %s3
  $region1: #{tpu_custom_call.1} parent=0
    #allocation3 [shape = 'u8[8192]{0}', space=vmem, size = 0x2000, scoped, tag = 'input window, operand 0, single buffered']
    #allocation4 [shape = 's32[1]{0}', space=sflag, size = 0x4, scoped, tag = 'scoped memory for tpu_custom_call.1']
    #allocation5 [shape = 's32[1]{0}', space=sflag, size = 0x4, scoped, tag = 'scoped memory for tpu_custom_call.1']
    #allocation6 [shape = 'u8[8192]{0}', space=vmem, size = 0x2000, scoped, tag = 'input window, operand 1, single buffered']
    #allocation7 [shape = 's32[1]{0}', space=sflag, size = 0x4, scoped, tag = 'scoped memory for tpu_custom_call.1']
    #allocation8 [shape = 'u8[8192]{0}', space=vmem, size = 0x2000, scoped, tag = 'output window, operand 0, single buffered']
    %10 = vsyncpa [#allocation4], 0
    %11 = vsyncpa [#allocation7], 0
    %12 = vsyncpa [#allocation5], 0
    // Predicated region
    $region2: #{tpu_custom_call.1} parent=1 // pred_check
      _
    $region3: #{tpu_custom_call.1} parent=1 // pred_check_branch
      %14 = sbr.rel (0) target = $region5
    $region4: #{tpu_custom_call.1} parent=1 // pred_region
      %s16 = ssub.s32 256, 256
      %17 = vsyncadd [#allocation4], %s16
      %s18 = sshll.u32 [#allocation3], 4
      %s19 = int_to_ptr.vmem [resolvable:$true] %s18
      %24 = dma.hbm_to_vmem [thread:$0]  %s0, 256, %s19, [#allocation4], 128, 128, 8
    $region5: #{tpu_custom_call.1} parent=1 // pred_fallthru
      _
    // Predicated region
    $region6: #{tpu_custom_call.1} parent=1 // pred_check
      _
    $region7: #{tpu_custom_call.1} parent=1 // pred_check_branch
      %26 = sbr.rel (0) target = $region9
    $region8: #{tpu_custom_call.1} parent=1 // pred_region
      %s28 = ssub.s32 256, 256
      %29 = vsyncadd [#allocation7], %s28
      %s30 = sshll.u32 [#allocation6], 4
      %s31 = int_to_ptr.vmem [resolvable:$true] %s30
      %36 = dma.hbm_to_vmem [thread:$0]  %s1, 256, %s31, [#allocation7], 128, 128, 8
    $region9: #{tpu_custom_call.1} parent=1 // pred_fallthru
      _
    // Predicated region
    $region10: #{tpu_custom_call.1} parent=1 // pred_check
      _
    $region11: #{tpu_custom_call.1} parent=1 // pred_check_branch
      %38 = sbr.rel (0) target = $region13
    $region12: #{tpu_custom_call.1} parent=1 // pred_region
      _
    $region13: #{tpu_custom_call.1} parent=1 // pred_fallthru
      _
    // Predicated region
    $region14: #{tpu_custom_call.1} parent=1 // pred_check
      _
    $region15: #{tpu_custom_call.1} parent=1 // pred_check_branch
      %40 = sbr.rel (0) target = $region17
    $region16: #{tpu_custom_call.1} parent=1 // pred_region
      _
    $region17: #{tpu_custom_call.1} parent=1 // pred_fallthru
      _
    // Predicated region
    $region18: #{tpu_custom_call.1} parent=1 // pred_check
      _
    $region19: #{tpu_custom_call.1} parent=1 // pred_check_branch
      %42 = sbr.rel (0) target = $region21
    $region20: #{tpu_custom_call.1} parent=1 // pred_region
      %43 = dma.done [#allocation4], 256
    $region21: #{tpu_custom_call.1} parent=1 // pred_fallthru
      _
    // Predicated region
    $region22: #{tpu_custom_call.1} parent=1 // pred_check
      _
    $region23: #{tpu_custom_call.1} parent=1 // pred_check_branch
      %45 = sbr.rel (0) target = $region25
    $region24: #{tpu_custom_call.1} parent=1 // pred_region
      %46 = dma.done [#allocation7], 256
    $region25: #{tpu_custom_call.1} parent=1 // pred_fallthru
      _
    %v47 = vld [vmem:[#allocation3] sm:$0xff]
    %v48 = vld [vmem:[#allocation3 + $0x8] sm:$0xff]
    %v49 = vld [vmem:[%s2] sm:$0x1]
    %v51 = vlaneseq
    %v52 = vshrl.u32 %v51, 7
    %v53 = vsub.s32 0, %v52
    %v54 = vrot.slane %v49, %v53
    %v56 = vmul.f32 %v47, %v54
    %v57 = vmul.f32 %v48, %v54
    %vm58 = vcmask 261120
    %v59 = vsel %vm58, %v56, 0.0
    %60 = vadd.xlane.f32.xlu0 %v59
    %v61 = vpop.xlane.xlu0 %60
    %v62 = vsel %vm58, %v57, 0.0
    %63 = vadd.xlane.f32.xlu0 %v62
    %v64 = vpop.xlane.xlu0 %63
    %v65 = vld [vmem:[#allocation6] sm:$0xff]
    %v66 = vld [vmem:[#allocation6 + $0x8] sm:$0xff]
    %v67 = vmul.f32 %v65, %v61
    %v68 = vmul.f32 %v66, %v64
    %s69 = sld [smem:[#allocation2]]
    %v70 = vstv %s69
    %v71 = vadd.f32 %v67, %v70
    %v72 = vadd.f32 %v68, %v70
    %v73 = vadd.f32 %v71, %v47
    %v74 = vadd.f32 %v72, %v48
    %75 = vst.msk [vmem:[#allocation8] sm:$0xff] %vm58, %v73
    %76 = vst.msk [vmem:[#allocation8 + $0x8] sm:$0xff] %vm58, %v74
    // Predicated region
    $region26: #{tpu_custom_call.1} parent=1 // pred_check
      _
    $region27: #{tpu_custom_call.1} parent=1 // pred_check_branch
      %78 = sbr.rel (0) target = $region29
    $region28: #{tpu_custom_call.1} parent=1 // pred_region
      %s80 = ssub.s32 256, 256
      %81 = vsyncadd [#allocation5], %s80
      %s82 = sshll.u32 [#allocation8], 4
      %s83 = int_to_ptr.vmem [resolvable:$true] %s82
      %88 = dma.vmem_to_hbm [thread:$0]  %s83, 256, %s4, [#allocation5], 128, 128, 8
    $region29: #{tpu_custom_call.1} parent=1 // pred_fallthru
      _
    // Predicated region
    $region30: #{tpu_custom_call.1} parent=1 // pred_check
      _
    $region31: #{tpu_custom_call.1} parent=1 // pred_check_branch
      %90 = sbr.rel (0) target = $region33
    $region32: #{tpu_custom_call.1} parent=1 // pred_region
      %91 = dma.done [#allocation5], 256
    $region33: #{tpu_custom_call.1} parent=1 // pred_fallthru
      _
    %92 = vsyncpa [#allocation4], 1
    %93 = vsyncpa [#allocation7], 1
    %94 = vsyncpa [#allocation5], 1

</llo_original>
